<compile_context>
chip_gen: v5e
topology: v5e:2x2
jax: 0.10.0
libtpu: 0.0.40
codegen_flags: <defaults>
</compile_context>

<pallas_src>
import numpy as np
import jax
import jax.numpy as jnp
from jax.experimental import pallas as pl
from jax.experimental.pallas import tpu as pltpu


def _bilinear_matrix(in_size: int, scale: int = 2) -> np.ndarray:
    """Dense (scale*in_size, in_size) matrix matching torch bilinear upsample,
    align_corners=False (half-pixel centers, negative source index clamped to 0)."""
    out_size = in_size * scale
    o = np.arange(out_size, dtype=np.float64)
    src = (o + 0.5) / scale - 0.5
    src = np.maximum(src, 0.0)
    i0 = np.floor(src).astype(np.int64)
    i0 = np.minimum(i0, in_size - 1)
    i1 = np.minimum(i0 + 1, in_size - 1)
    lam = (src - i0).astype(np.float32)
    R = np.zeros((out_size, in_size), np.float32)
    R[np.arange(out_size), i0] += 1.0 - lam
    R[np.arange(out_size), i1] += lam
    return R


def make_upsample_params(conv_weight, H, W, dtype=jnp.float32):
    """Precompute the interpolation operands once (hoisted out of the call path)."""
    rh = jnp.asarray(_bilinear_matrix(H), dtype=dtype)                      # (OH, H)
    rw = _bilinear_matrix(W)                                                # (OW, W)
    wmat = jnp.transpose(conv_weight[:, :, 0, 0]).astype(jnp.float32)       # (Cin, Cout)
    # Fused column interpolation + 1x1 conv: kron(Rw^T, Wmat) -> (W*Cin, OW*Cout).
    rwk = jnp.kron(jnp.asarray(rw.T), wmat).astype(dtype)
    return rh, rwk


def _upsample_conv_kernel(rh_ref, rwk_ref, x_ref, o_ref):
    # rh_ref : (OH, H)           row-interpolation matrix (constant, single-buffered)
    # rwk_ref: (W*Cin, OW*Cout)  fused col-interp + 1x1 conv (constant, single-buffered)
    # x_ref  : (Nb*H, W*Cin)     Nb batch elements, channels-last lane-flattened
    # o_ref  : (Nb*OH, OW*Cout)  lane-dense output slab
    oh, h = rh_ref.shape
    nb = x_ref.shape[0] // h
    for b in range(nb):  # static unroll; Nb is small
        # Pass 1: row interpolation for this batch element.
        t = jnp.dot(rh_ref[...], x_ref[b * h:(b + 1) * h, :],
                    preferred_element_type=jnp.float32)
        # Pass 2: column interpolation + 1x1 conv, fused into a single MXU matmul.
        o_ref[b * oh:(b + 1) * oh, :] = jnp.dot(
            t.astype(rwk_ref.dtype), rwk_ref[...],
            preferred_element_type=jnp.float32).astype(o_ref.dtype)


def _const_in_spec(block_shape):
    """Constant-indexed input spec, single-buffered when the JAX version allows it."""
    try:
        return pl.BlockSpec(block_shape, lambda i: (0, 0),
                            pipeline_mode=pl.Buffered(1))
    except TypeError:  # older JAX without pipeline_mode: fall back to default buffering
        return pl.BlockSpec(block_shape, lambda i: (0, 0))


def upsample_conv1x1(x_nchw, rh, rwk, *, batch_block=None):
    """x_nchw: (N, Cin, H, W); rh/rwk from make_upsample_params -> (N, Cout, 2H, 2W)."""
    N, Cin, H, W = x_nchw.shape
    OH, OW = 2 * H, 2 * W
    WCin, OWCout = rwk.shape
    Cout = OWCout // OW
    assert WCin == W * Cin and rh.shape == (OH, H)

    # Default: grid of 2 parallel steps (keeps both v7x TensorCores busy; only one
    # extra ~0.35us step on single-TC v5e/v6e).  Pass batch_block=N for grid=1.
    if batch_block is None:
        batch_block = N // 2 if (N % 2 == 0 and N > 1) else N
    Nb = batch_block
    assert N % Nb == 0, "batch_block must divide N"
    assert (Nb * H) % 8 == 0, "x block sublane dim must be 8-aligned"

    # NCHW -> lane-flattened channels-last 2-D slab (lane dim W*Cin, 128 at test size).
    x_flat = (jnp.transpose(x_nchw, (0, 2, 3, 1))
              .reshape(N * H, W * Cin)
              .astype(rh.dtype))

    out_dtype = x_nchw.dtype
    flops = 2 * N * OH * H * WCin + 2 * N * OH * WCin * OWCout
    bytes_accessed = (x_flat.size * x_flat.dtype.itemsize
                      + rh.size * rh.dtype.itemsize
                      + rwk.size * rwk.dtype.itemsize
                      + N * OH * OWCout * jnp.dtype(out_dtype).itemsize)

    out2d = pl.pallas_call(
        _upsample_conv_kernel,
        out_shape=jax.ShapeDtypeStruct((N * OH, OWCout), out_dtype),
        grid_spec=pltpu.PrefetchScalarGridSpec(
            num_scalar_prefetch=0,
            grid=(N // Nb,),
            in_specs=[
                _const_in_spec((OH, H)),            # constant, single-buffered
                _const_in_spec((WCin, OWCout)),     # constant, single-buffered
                pl.BlockSpec((Nb * H, WCin), lambda i: (i, 0)),
            ],
            out_specs=pl.BlockSpec((Nb * OH, OWCout), lambda i: (i, 0)),
        ),
        compiler_params=pltpu.CompilerParams(
            dimension_semantics=("parallel",)),
        cost_estimate=pl.CostEstimate(
            flops=flops, transcendentals=0, bytes_accessed=bytes_accessed),
    )(rh, rwk, x_flat)

    out = out2d.reshape(N, OH, OW, Cout)
    return jnp.transpose(out, (0, 3, 1, 2))                                  # (N, Cout, 2H, 2W)


def upsample_conv1x1_ref(x_nchw, conv_weight):
    """Plain-JAX f32 reference (same align_corners=False bilinear convention)."""
    hp = jax.lax.Precision.HIGHEST
    rh = jnp.asarray(_bilinear_matrix(x_nchw.shape[2]))
    rw = jnp.asarray(_bilinear_matrix(x_nchw.shape[3]))
    up = jnp.einsum('Oh,nchw->ncOw', rh, x_nchw, precision=hp)
    up = jnp.einsum('Ww,ncow->ncoW', rw, up, precision=hp)
    wmat = conv_weight[:, :, 0, 0]                                           # (Cout, Cin)
    return jnp.einsum('dc,ncow->ndow', wmat, up, precision=hp)


if __name__ == "__main__":
    key = jax.random.PRNGKey(0)
    k_x, k_w = jax.random.split(key)

    # UpSample(in_channels=4, s_factor=4): conv maps 8 -> 4 channels.
    in_channels, s_factor = 4, 4
    N, H, W = 4, 16, 16
    Cin = in_channels + s_factor

    x = jax.random.normal(k_x, (N, Cin, H, W), dtype=jnp.float32)

    # Deterministic conv weight init (PyTorch Conv2d default bound 1/sqrt(fan_in)).
    bound = 1.0 / np.sqrt(Cin * 1 * 1)
    conv_w = jax.random.uniform(
        k_w, (in_channels, Cin, 1, 1), dtype=jnp.float32, minval=-bound, maxval=bound)

    # Constants hoisted out of the call path and computed once.
    rh, rwk = make_upsample_params(conv_w, H, W)

    fwd = jax.jit(upsample_conv1x1, static_argnames=("batch_block",))
    out = fwd(x, rh, rwk)                       # default: Nb=N/2 -> grid=(2,), parallel
    out = jax.block_until_ready(out)

    assert out.shape == (N, in_channels, 2 * H, 2 * W), out.shape
    ref = upsample_conv1x1_ref(x, conv_w)
    np.testing.assert_allclose(np.asarray(out), np.asarray(ref), rtol=2e-2, atol=2e-2)

    print("KERNEL_OK")
</pallas_src>

<mosaic_0001>
module attributes {stable_mosaic.version = 11 : i64} {
  func.func @_upsample_conv_kernel(%arg0: i32, %arg1: memref<32x16xf32, #tpu.memory_space<vmem>>, %arg2: memref<128x128xf32, #tpu.memory_space<vmem>>, %arg3: memref<32x128xf32, #tpu.memory_space<vmem>>, %arg4: memref<64x128xf32, #tpu.memory_space<vmem>>) attributes {dimension_semantics = [#tpu.dimension_semantics<parallel>], iteration_bounds = array<i64: 2>, scalar_prefetch = 0 : i64, scratch_operands = 0 : i64, tpu.core_type = #tpu.core_type<tc>, window_params = [{pipeline_mode = #tpu.pipeline_mode<synchronous>, transform_indices = @transform_0, window_bounds = array<i64: 32, 16>}, {pipeline_mode = #tpu.pipeline_mode<synchronous>, transform_indices = @transform_1, window_bounds = array<i64: 128, 128>}, {transform_indices = @transform_2, window_bounds = array<i64: 32, 128>}, {transform_indices = @transform_3, window_bounds = array<i64: 64, 128>}]} {
    %c0 = arith.constant 0 : index
    %c0_0 = arith.constant 0 : index
    %0 = vector.load %arg1[%c0, %c0_0] : memref<32x16xf32, #tpu.memory_space<vmem>>, vector<32x16xf32>
    %c0_1 = arith.constant 0 : index
    %c0_2 = arith.constant 0 : index
    %1 = vector.load %arg3[%c0_1, %c0_2] : memref<32x128xf32, #tpu.memory_space<vmem>>, vector<16x128xf32>
    %cst = arith.constant dense<0.000000e+00> : vector<32x128xf32>
    %2 = tpu.matmul %0, %1, %cst {dimension_numbers = #tpu.dot_dimension_numbers<[1], [0], [0], [1], [0, 0, 1, 1], [], []>} : vector<32x16xf32>, vector<16x128xf32>, vector<32x128xf32> -> vector<32x128xf32>
    %c0_3 = arith.constant 0 : index
    %c0_4 = arith.constant 0 : index
    %3 = vector.load %arg2[%c0_3, %c0_4] : memref<128x128xf32, #tpu.memory_space<vmem>>, vector<128x128xf32>
    %cst_5 = arith.constant dense<0.000000e+00> : vector<32x128xf32>
    %4 = tpu.matmul %2, %3, %cst_5 {dimension_numbers = #tpu.dot_dimension_numbers<[1], [0], [0], [1], [0, 0, 1, 1], [], []>} : vector<32x128xf32>, vector<128x128xf32>, vector<32x128xf32> -> vector<32x128xf32>
    %c0_6 = arith.constant 0 : index
    %c0_7 = arith.constant 0 : index
    %5 = vector.load %arg4[%c0_6, %c0_7] : memref<64x128xf32, #tpu.memory_space<vmem>>, vector<32x128xf32>
    tpu.vector_store %arg4[%c0_6, %c0_7], %4 {strides = array<i32>} : memref<64x128xf32, #tpu.memory_space<vmem>>, vector<32x128xf32>,
    %c0_8 = arith.constant 0 : index
    %c0_9 = arith.constant 0 : index
    %6 = vector.load %arg1[%c0_8, %c0_9] : memref<32x16xf32, #tpu.memory_space<vmem>>, vector<32x16xf32>
    %c16 = arith.constant 16 : index
    %c0_10 = arith.constant 0 : index
    %7 = vector.load %arg3[%c16, %c0_10] : memref<32x128xf32, #tpu.memory_space<vmem>>, vector<16x128xf32>
    %cst_11 = arith.constant dense<0.000000e+00> : vector<32x128xf32>
    %8 = tpu.matmul %6, %7, %cst_11 {dimension_numbers = #tpu.dot_dimension_numbers<[1], [0], [0], [1], [0, 0, 1, 1], [], []>} : vector<32x16xf32>, vector<16x128xf32>, vector<32x128xf32> -> vector<32x128xf32>
    %c0_12 = arith.constant 0 : index
    %c0_13 = arith.constant 0 : index
    %9 = vector.load %arg2[%c0_12, %c0_13] : memref<128x128xf32, #tpu.memory_space<vmem>>, vector<128x128xf32>
    %cst_14 = arith.constant dense<0.000000e+00> : vector<32x128xf32>
    %10 = tpu.matmul %8, %9, %cst_14 {dimension_numbers = #tpu.dot_dimension_numbers<[1], [0], [0], [1], [0, 0, 1, 1], [], []>} : vector<32x128xf32>, vector<128x128xf32>, vector<32x128xf32> -> vector<32x128xf32>
    %c32 = arith.constant 32 : index
    %c0_15 = arith.constant 0 : index
    %11 = vector.load %arg4[%c32, %c0_15] : memref<64x128xf32, #tpu.memory_space<vmem>>, vector<32x128xf32>
    tpu.vector_store %arg4[%c32, %c0_15], %10 {strides = array<i32>} : memref<64x128xf32, #tpu.memory_space<vmem>>, vector<32x128xf32>,
    return
  }
  func.func @transform_0(%arg0: i32) -> (i32, i32) {
    %c0_i32 = arith.constant 0 : i32
    %c0_i32_0 = arith.constant 0 : i32
    %c0_i32_1 = arith.constant 0 : i32
    return %c0_i32, %c0_i32_0 : i32, i32
  }
  func.func @transform_1(%arg0: i32) -> (i32, i32) {
    %c0_i32 = arith.constant 0 : i32
    %c0_i32_0 = arith.constant 0 : i32
    %c0_i32_1 = arith.constant 0 : i32
    return %c0_i32, %c0_i32_0 : i32, i32
  }
  func.func @transform_2(%arg0: i32) -> (i32, i32) {
    %c0_i32 = arith.constant 0 : i32
    %c0_i32_0 = arith.constant 0 : i32
    return %arg0, %c0_i32 : i32, i32
  }
  func.func @transform_3(%arg0: i32) -> (i32, i32) {
    %c0_i32 = arith.constant 0 : i32
    %c0_i32_0 = arith.constant 0 : i32
    return %arg0, %c0_i32 : i32, i32
  }
}

</mosaic_0001>

<llo_original>
// kernel: upsample_conv1x1.1
$region0: #{upsample_conv1x1.1}
  #allocation0 [shape = 'u32[]', space=smem, size = 0x4, offset = 0x4, fixed_abs, tag = 'smem constant byte address 0x4 - core index']
  #allocation1 [shape = 'u32[72,128]{1,0:T(1,128)}', space=vmem, size = 0x9000, scoped, tag = 'internal scratch']
  %s0 = inlined_call_operand.vmem [shape: f32[32,16], index: 0, kind: input, shape index: {}]
  %s1 = inlined_call_operand.vmem [shape: f32[128,128], index: 1, kind: input, shape index: {}]
  %s2 = inlined_call_operand.vmem [shape: f32[64,128], index: 2, kind: input, shape index: {}]
  %s3 = inlined_call_operand.vmem [shape: f32[128,128], index: 3, kind: output, shape index: {}]
  %s4 = sld [smem:[#allocation0]]
  $region45: #{upsample_conv1x1.1} parent=0
    _
  %s6 = ssub.s32 1, %s4
  %s7 = scalar_select 0, %s6, %s4
  loop: start=0, step=1, limit=4
  $region2: #{upsample_conv1x1.1} parent=0 // loop_pre_header
    _
  $region3: #{upsample_conv1x1.1} parent=0 // loop_header
    %s9 = sphi 0, %s13
    %p10 = scmp.ge.s32.totalorder %s9, 4
    %s17 = sphi 0, %s17
    %s19 = sphi 0, %s17
    %s20 = sphi 0, %s19
    %s34 = sphi 0, %s20
    %s38 = sphi 0, %s38
    %s40 = sphi 0, %s38
    %s41 = sphi 0, %s40
    %s55 = sphi 0, %s41
    %s61 = sphi 0, %s63
    %s64 = sphi 0, %s61
    %s65 = sphi 0, %s64
    %s81 = sphi 0, %s65
    %s87 = sphi 0, %s89
    %s90 = sphi 0, %s87
    %s91 = sphi 0, %s90
    %s107 = sphi 0, %s91
  $region4: #{upsample_conv1x1.1} parent=0 // loop_header_branch
    %12 = sbr.rel (%p10) target = $region8
  $region5: #{upsample_conv1x1.1} parent=0 // loop_body
    %s14 = ssub.s32 %s9, 1
    %s15 = ssub.s32 %s9, 2
    %s16 = sadd.s32 %s9, 1
    %s18 = sadd.s32 %s17, 1
    %p21 = scmp.eq.s32.totalorder %s9, 1
    %p22 = scmp.ne.s32.totalorder %s17, %s19
    %p23 = scmp.eq.s32.totalorder %s9, 0
    %p24 = por %p22, %p23
    %p25 = scmp.ne.s32.totalorder %s17, %s19
    %p26 = scmp.eq.s32.totalorder %s14, 1
    %p27 = por %p25, %p26
    %p28 = scmp.ne.s32.totalorder %s19, %s20
    %p29 = scmp.eq.s32.totalorder %s14, 0
    %p30 = por %p28, %p29
    %p31 = scmp.ne.s32.totalorder %s19, %s20
    %p32 = scmp.eq.s32.totalorder %s15, 1
    %p33 = por %p31, %p32
    %p35 = scmp.ne.s32.totalorder %s20, %s34
    %p36 = scmp.eq.s32.totalorder %s15, 0
    %p37 = por %p35, %p36
    %s39 = sadd.s32 %s38, 1
    %p42 = scmp.eq.s32.totalorder %s9, 1
    %p43 = scmp.ne.s32.totalorder %s38, %s40
    %p44 = scmp.eq.s32.totalorder %s9, 0
    %p45 = por %p43, %p44
    %p46 = scmp.ne.s32.totalorder %s38, %s40
    %p47 = scmp.eq.s32.totalorder %s14, 1
    %p48 = por %p46, %p47
    %p49 = scmp.ne.s32.totalorder %s40, %s41
    %p50 = scmp.eq.s32.totalorder %s14, 0
    %p51 = por %p49, %p50
    %p52 = scmp.ne.s32.totalorder %s40, %s41
    %p53 = scmp.eq.s32.totalorder %s15, 1
    %p54 = por %p52, %p53
    %p56 = scmp.ne.s32.totalorder %s41, %s55
    %p57 = scmp.eq.s32.totalorder %s15, 0
    %p58 = por %p56, %p57
    %s59 = ssub.s32 %s9, %s16
    %p60 = scmp.eq.s32.totalorder %s59, 0
    %s62 = sadd.s32 %s61, 1
    %s63 = scalar_select %p60, %s61, %s62
    %p66 = pneg %p60
    %p67 = scmp.eq.s32.totalorder %s9, 1
    %p68 = por %p66, %p67
    %p69 = scmp.ne.s32.totalorder %s61, %s64
    %p70 = scmp.eq.s32.totalorder %s9, 0
    %p71 = por %p69, %p70
    %p72 = scmp.ne.s32.totalorder %s61, %s64
    %p73 = scmp.eq.s32.totalorder %s14, 1
    %p74 = por %p72, %p73
    %p75 = scmp.ne.s32.totalorder %s64, %s65
    %p76 = scmp.eq.s32.totalorder %s14, 0
    %p77 = por %p75, %p76
    %p78 = scmp.ne.s32.totalorder %s64, %s65
    %p79 = scmp.eq.s32.totalorder %s15, 1
    %p80 = por %p78, %p79
    %p82 = scmp.ne.s32.totalorder %s65, %s81
    %p83 = scmp.eq.s32.totalorder %s15, 0
    %p84 = por %p82, %p83
    %s85 = ssub.s32 %s9, %s16
    %p86 = scmp.eq.s32.totalorder %s85, 0
    %s88 = sadd.s32 %s87, 1
    %s89 = scalar_select %p86, %s87, %s88
    %p92 = pneg %p86
    %p93 = scmp.eq.s32.totalorder %s9, 1
    %p94 = por %p92, %p93
    %p95 = scmp.ne.s32.totalorder %s87, %s90
    %p96 = scmp.eq.s32.totalorder %s9, 0
    %p97 = por %p95, %p96
    %p98 = scmp.ne.s32.totalorder %s87, %s90
    %p99 = scmp.eq.s32.totalorder %s14, 1
    %p100 = por %p98, %p99
    %p101 = scmp.ne.s32.totalorder %s90, %s91
    %p102 = scmp.eq.s32.totalorder %s14, 0
    %p103 = por %p101, %p102
    %p104 = scmp.ne.s32.totalorder %s90, %s91
    %p105 = scmp.eq.s32.totalorder %s15, 1
    %p106 = por %p104, %p105
    %p108 = scmp.ne.s32.totalorder %s91, %s107
    %p109 = scmp.eq.s32.totalorder %s15, 0
    %p110 = por %p108, %p109
    %p111 = scmp.le.s32.totalorder 1, %s9
    %p112 = scmp.lt.s32.totalorder %s9, 3
    %p113 = pnand %p111, %p112
    %p114 = pneg %p113
    // Predicated region
    $region9: #{upsample_conv1x1.1} parent=5 // pred_check
      _
    $region10: #{upsample_conv1x1.1} parent=5 // pred_check_branch
      %116 = sbr.rel (%p113) target = $region12
    $region11: #{upsample_conv1x1.1} parent=5 // pred_region
      %s117 = ssub.s32 %s9, 1
      // Predicated region
      $region13: #{upsample_conv1x1.1} parent=11 // pred_check
        %p118 = pneg %p30
      $region14: #{upsample_conv1x1.1} parent=11 // pred_check_branch
        %120 = sbr.rel (%p118) target = $region16
      $region15: #{upsample_conv1x1.1} parent=11 // pred_region
        _
      $region16: #{upsample_conv1x1.1} parent=11 // pred_fallthru
        _
      // Predicated region
      $region17: #{upsample_conv1x1.1} parent=11 // pred_check
        %p121 = pneg %p51
      $region18: #{upsample_conv1x1.1} parent=11 // pred_check_branch
        %123 = sbr.rel (%p121) target = $region20
      $region19: #{upsample_conv1x1.1} parent=11 // pred_region
        _
      $region20: #{upsample_conv1x1.1} parent=11 // pred_fallthru
        _
    $region12: #{upsample_conv1x1.1} parent=5 // pred_fallthru
      _
    %p124 = scmp.lt.s32.totalorder %s9, 2
    // Predicated region
    $region21: #{upsample_conv1x1.1} parent=5 // pred_check
      %p125 = pneg %p124
    $region22: #{upsample_conv1x1.1} parent=5 // pred_check_branch
      %127 = sbr.rel (%p125) target = $region24
    $region23: #{upsample_conv1x1.1} parent=5 // pred_region
      // Predicated region
      $region25: #{upsample_conv1x1.1} parent=23 // pred_check
        %p128 = pneg %p71
      $region26: #{upsample_conv1x1.1} parent=23 // pred_check_branch
        %130 = sbr.rel (%p128) target = $region28
      $region27: #{upsample_conv1x1.1} parent=23 // pred_region
        %s131 = smul.u32 4, %s9
        %p132 = scmp.lt.s32.totalorder %s131, 7
        %s133 = scalar_select %p132, %s131, 7
        %s134 = smul.addr %s133, 8
        %s135 = scalar_lea.vmem %s2, %s134
        %s136 = smul.u32 4, %s9
      $region28: #{upsample_conv1x1.1} parent=23 // pred_fallthru
        _
    $region24: #{upsample_conv1x1.1} parent=5 // pred_fallthru
      _
    %p137 = scmp.le.s32.totalorder 1, %s9
    %p138 = scmp.lt.s32.totalorder %s9, 3
    %p139 = pnand %p137, %p138
    %p140 = pneg %p139
    // Predicated region
    $region29: #{upsample_conv1x1.1} parent=5 // pred_check
      _
    $region30: #{upsample_conv1x1.1} parent=5 // pred_check_branch
      %142 = sbr.rel (%p139) target = $region32
    $region31: #{upsample_conv1x1.1} parent=5 // pred_region
      %s143 = ssub.s32 %s9, 1
      %p144 = pneg %p30
      %p145 = pneg %p27
      %p146 = pneg %p51
      %p147 = pneg %p48
      %s148 = smul.u32 4, %s14
      %p149 = scmp.lt.s32.totalorder %s148, 7
      %s150 = scalar_select %p149, %s148, 7
      %s151 = smul.addr %s150, 8
      %s152 = scalar_lea.vmem %s2, %s151
      %p153 = pneg %p77
      %p154 = pneg %p74
      %p155 = pneg %p103
      %p156 = pneg %p100
      %s157 = smul.u32 8, %s14
      %p158 = scmp.lt.s32.totalorder %s157, 15
      %s159 = scalar_select %p158, %s157, 15
      %s160 = smul.addr %s159, 8
      %s161 = scalar_lea.vmem %s3, %s160
      %s162 = smul.u32 4, %s14
      %p163 = scmp.lt.s32.totalorder %s162, 7
      %s164 = scalar_select %p163, %s162, 7
      %s165 = smul.addr %s164, 8
      %s166 = scalar_lea.vmem %s2, %s165
      %s167 = smul.u32 4, %s14
      %s168 = smul.u32 8, %s14
      %p169 = scmp.lt.s32.totalorder %s168, 15
      %s170 = scalar_select %p169, %s168, 15
      %s171 = smul.addr %s170, 8
      %s172 = scalar_lea.vmem %s3, %s171
      %s173 = smul.u32 8, %s14
      %v174 = vld [vmem:[%s0] sm:$0xff]
      %v175 = vld [vmem:[%s0 + $0x8] sm:$0xff]
      %v176 = vld [vmem:[%s0 + $0x10] sm:$0xff]
      %v177 = vld [vmem:[%s0 + $0x18] sm:$0xff]
      %v178 = vld [vmem:[%s166] sm:$0xff]
      %v179 = vld [vmem:[%s166 + $0x8] sm:$0xff]
      %vm180 = vcmask 130048
      %v182 = vsel %vm180, %v174, 0
      %v185 = vsel %vm180, %v175, 0
      %v188 = vsel %vm180, %v176, 0
      %v191 = vsel %vm180, %v177, 0
      %193 = vmatpush.msra.mxu0 0.0
      %194 = vmatpush.msra.mxu0 0.0
      %195 = vmatpush.msra.mxu0 0.0
      %196 = vmatpush.msra.mxu0 0.0
      %197 = vmatpush.msra.mxu0 0.0
      %198 = vmatpush.msra.mxu0 0.0
      %199 = vmatpush.msra.mxu0 0.0
      %200 = vmatpush.msra.mxu0 0.0
      %201 = vmatpush.msra.mxu0 0.0
      %202 = vmatpush.msra.mxu0 0.0
      %203 = vmatpush.msra.mxu0 0.0
      %204 = vmatpush.msra.mxu0 0.0
      %205 = vmatpush.msra.mxu0 0.0
      %206 = vmatpush.msra.mxu0 0.0
      %207 = vmatpush.msra.mxu0 %v179
      %208 = vmatpush.msra.mxu0 %v178
      %209 = vmatmul.f32.gmra.mxu0 %v182
      %v210 = vpop.f32.mrf.mxu0
      %v211 = vadd.f32 0.0, %v210
      %212 = vmatmul.f32.gmra.mxu0 %v185
      %v213 = vpop.f32.mrf.mxu0
      %v214 = vadd.f32 0.0, %v213
      %215 = vmatmul.f32.gmra.mxu0 %v188
      %v216 = vpop.f32.mrf.mxu0
      %v217 = vadd.f32 0.0, %v216
      %218 = vmatmul.f32.gmra.mxu0 %v191
      %v219 = vpop.f32.mrf.mxu0
      %v220 = vadd.f32 0.0, %v219
      %221 = vdwg.mxu0
      %v222 = vld [vmem:[%s1] sm:$0xff]
      %v223 = vld [vmem:[%s1 + $0x8] sm:$0xff]
      %v224 = vld [vmem:[%s1 + $0x10] sm:$0xff]
      %v225 = vld [vmem:[%s1 + $0x18] sm:$0xff]
      %v226 = vld [vmem:[%s1 + $0x20] sm:$0xff]
      %v227 = vld [vmem:[%s1 + $0x28] sm:$0xff]
      %v228 = vld [vmem:[%s1 + $0x30] sm:$0xff]
      %v229 = vld [vmem:[%s1 + $0x38] sm:$0xff]
      %v230 = vld [vmem:[%s1 + $0x40] sm:$0xff]
      %v231 = vld [vmem:[%s1 + $0x48] sm:$0xff]
      %v232 = vld [vmem:[%s1 + $0x50] sm:$0xff]
      %v233 = vld [vmem:[%s1 + $0x58] sm:$0xff]
      %v234 = vld [vmem:[%s1 + $0x60] sm:$0xff]
      %v235 = vld [vmem:[%s1 + $0x68] sm:$0xff]
      %v236 = vld [vmem:[%s1 + $0x70] sm:$0xff]
      %v237 = vld [vmem:[%s1 + $0x78] sm:$0xff]
      %238 = vmatpush.msra.mxu0 %v237
      %239 = vmatpush.msra.mxu0 %v236
      %240 = vmatpush.msra.mxu0 %v235
      %241 = vmatpush.msra.mxu0 %v234
      %242 = vmatpush.msra.mxu0 %v233
      %243 = vmatpush.msra.mxu0 %v232
      %244 = vmatpush.msra.mxu0 %v231
      %245 = vmatpush.msra.mxu0 %v230
      %246 = vmatpush.msra.mxu0 %v229
      %247 = vmatpush.msra.mxu0 %v228
      %248 = vmatpush.msra.mxu0 %v227
      %249 = vmatpush.msra.mxu0 %v226
      %250 = vmatpush.msra.mxu0 %v225
      %251 = vmatpush.msra.mxu0 %v224
      %252 = vmatpush.msra.mxu0 %v223
      %253 = vmatpush.msra.mxu0 %v222
      %254 = vmatmul.f32.gmra.mxu0 %v211
      %v255 = vpop.f32.mrf.mxu0
      %v256 = vadd.f32 0.0, %v255
      %257 = vmatmul.f32.gmra.mxu0 %v214
      %v258 = vpop.f32.mrf.mxu0
      %v259 = vadd.f32 0.0, %v258
      %260 = vmatmul.f32.gmra.mxu0 %v217
      %v261 = vpop.f32.mrf.mxu0
      %v262 = vadd.f32 0.0, %v261
      %263 = vmatmul.f32.gmra.mxu0 %v220
      %v264 = vpop.f32.mrf.mxu0
      %v265 = vadd.f32 0.0, %v264
      %266 = vdwg.mxu0
      %267 = vst [vmem:[%s172] sm:$0xff] %v256
      %268 = vst [vmem:[%s172 + $0x8] sm:$0xff] %v259
      %269 = vst [vmem:[%s172 + $0x10] sm:$0xff] %v262
      %270 = vst [vmem:[%s172 + $0x18] sm:$0xff] %v265
      %v271 = vld [vmem:[%s0] sm:$0xff]
      %v272 = vld [vmem:[%s0 + $0x8] sm:$0xff]
      %v273 = vld [vmem:[%s0 + $0x10] sm:$0xff]
      %v274 = vld [vmem:[%s0 + $0x18] sm:$0xff]
      %v275 = vld [vmem:[%s166 + $0x10] sm:$0xff]
      %v276 = vld [vmem:[%s166 + $0x18] sm:$0xff]
      %v278 = vsel %vm180, %v271, 0
      %v281 = vsel %vm180, %v272, 0
      %v284 = vsel %vm180, %v273, 0
      %v287 = vsel %vm180, %v274, 0
      %289 = vmatpush.msra.mxu0 0.0
      %290 = vmatpush.msra.mxu0 0.0
      %291 = vmatpush.msra.mxu0 0.0
      %292 = vmatpush.msra.mxu0 0.0
      %293 = vmatpush.msra.mxu0 0.0
      %294 = vmatpush.msra.mxu0 0.0
      %295 = vmatpush.msra.mxu0 0.0
      %296 = vmatpush.msra.mxu0 0.0
      %297 = vmatpush.msra.mxu0 0.0
      %298 = vmatpush.msra.mxu0 0.0
      %299 = vmatpush.msra.mxu0 0.0
      %300 = vmatpush.msra.mxu0 0.0
      %301 = vmatpush.msra.mxu0 0.0
      %302 = vmatpush.msra.mxu0 0.0
      %303 = vmatpush.msra.mxu0 %v276
      %304 = vmatpush.msra.mxu0 %v275
      %305 = vmatmul.f32.gmra.mxu0 %v278
      %v306 = vpop.f32.mrf.mxu0
      %v307 = vadd.f32 0.0, %v306
      %308 = vmatmul.f32.gmra.mxu0 %v281
      %v309 = vpop.f32.mrf.mxu0
      %v310 = vadd.f32 0.0, %v309
      %311 = vmatmul.f32.gmra.mxu0 %v284
      %v312 = vpop.f32.mrf.mxu0
      %v313 = vadd.f32 0.0, %v312
      %314 = vmatmul.f32.gmra.mxu0 %v287
      %v315 = vpop.f32.mrf.mxu0
      %v316 = vadd.f32 0.0, %v315
      %317 = vdwg.mxu0
      %v318 = vld [vmem:[%s1] sm:$0xff]
      %v319 = vld [vmem:[%s1 + $0x8] sm:$0xff]
      %v320 = vld [vmem:[%s1 + $0x10] sm:$0xff]
      %v321 = vld [vmem:[%s1 + $0x18] sm:$0xff]
      %v322 = vld [vmem:[%s1 + $0x20] sm:$0xff]
      %v323 = vld [vmem:[%s1 + $0x28] sm:$0xff]
      %v324 = vld [vmem:[%s1 + $0x30] sm:$0xff]
      %v325 = vld [vmem:[%s1 + $0x38] sm:$0xff]
      %v326 = vld [vmem:[%s1 + $0x40] sm:$0xff]
      %v327 = vld [vmem:[%s1 + $0x48] sm:$0xff]
      %v328 = vld [vmem:[%s1 + $0x50] sm:$0xff]
      %v329 = vld [vmem:[%s1 + $0x58] sm:$0xff]
      %v330 = vld [vmem:[%s1 + $0x60] sm:$0xff]
      %v331 = vld [vmem:[%s1 + $0x68] sm:$0xff]
      %v332 = vld [vmem:[%s1 + $0x70] sm:$0xff]
      %v333 = vld [vmem:[%s1 + $0x78] sm:$0xff]
      %334 = vmatpush.msra.mxu0 %v333
      %335 = vmatpush.msra.mxu0 %v332
      %336 = vmatpush.msra.mxu0 %v331
      %337 = vmatpush.msra.mxu0 %v330
      %338 = vmatpush.msra.mxu0 %v329
      %339 = vmatpush.msra.mxu0 %v328
      %340 = vmatpush.msra.mxu0 %v327
      %341 = vmatpush.msra.mxu0 %v326
      %342 = vmatpush.msra.mxu0 %v325
      %343 = vmatpush.msra.mxu0 %v324
      %344 = vmatpush.msra.mxu0 %v323
      %345 = vmatpush.msra.mxu0 %v322
      %346 = vmatpush.msra.mxu0 %v321
      %347 = vmatpush.msra.mxu0 %v320
      %348 = vmatpush.msra.mxu0 %v319
      %349 = vmatpush.msra.mxu0 %v318
      %350 = vmatmul.f32.gmra.mxu0 %v307
      %v351 = vpop.f32.mrf.mxu0
      %v352 = vadd.f32 0.0, %v351
      %353 = vmatmul.f32.gmra.mxu0 %v310
      %v354 = vpop.f32.mrf.mxu0
      %v355 = vadd.f32 0.0, %v354
      %356 = vmatmul.f32.gmra.mxu0 %v313
      %v357 = vpop.f32.mrf.mxu0
      %v358 = vadd.f32 0.0, %v357
      %359 = vmatmul.f32.gmra.mxu0 %v316
      %v360 = vpop.f32.mrf.mxu0
      %v361 = vadd.f32 0.0, %v360
      %362 = vdwg.mxu0
      %363 = vst [vmem:[%s172 + $0x20] sm:$0xff] %v352
      %364 = vst [vmem:[%s172 + $0x28] sm:$0xff] %v355
      %365 = vst [vmem:[%s172 + $0x30] sm:$0xff] %v358
      %366 = vst [vmem:[%s172 + $0x38] sm:$0xff] %v361
      %s367 = smul.u32 8, %s14
      %p368 = scmp.lt.s32.totalorder %s367, 15
      %s369 = scalar_select %p368, %s367, 15
      %s370 = smul.addr %s369, 8
      %s371 = scalar_lea.vmem %s3, %s370
      // Predicated region
      $region33: #{upsample_conv1x1.1} parent=31 // pred_check
        %p372 = pneg %p100
      $region34: #{upsample_conv1x1.1} parent=31 // pred_check_branch
        %374 = sbr.rel (%p372) target = $region36
      $region35: #{upsample_conv1x1.1} parent=31 // pred_region
        %s375 = smul.u32 8, %s14
      $region36: #{upsample_conv1x1.1} parent=31 // pred_fallthru
        _
    $region32: #{upsample_conv1x1.1} parent=5 // pred_fallthru
      _
    %p376 = scmp.le.s32.totalorder 2, %s9
    // Predicated region
    $region37: #{upsample_conv1x1.1} parent=5 // pred_check
      %p377 = pneg %p376
    $region38: #{upsample_conv1x1.1} parent=5 // pred_check_branch
      %379 = sbr.rel (%p377) target = $region40
    $region39: #{upsample_conv1x1.1} parent=5 // pred_region
      %s380 = ssub.s32 %s9, 2
      // Predicated region
      $region41: #{upsample_conv1x1.1} parent=39 // pred_check
        %p381 = pneg %p106
      $region42: #{upsample_conv1x1.1} parent=39 // pred_check_branch
        %383 = sbr.rel (%p381) target = $region44
      $region43: #{upsample_conv1x1.1} parent=39 // pred_region
        %s384 = smul.u32 8, %s15
        %p385 = scmp.lt.s32.totalorder %s384, 15
        %s386 = scalar_select %p385, %s384, 15
        %s387 = smul.addr %s386, 8
        %s388 = scalar_lea.vmem %s3, %s387
      $region44: #{upsample_conv1x1.1} parent=39 // pred_fallthru
        _
    $region40: #{upsample_conv1x1.1} parent=5 // pred_fallthru
      _
  $region6: #{upsample_conv1x1.1} parent=0 // loop_footer
    %s13 = sadd.s32 1, %s9
  $region7: #{upsample_conv1x1.1} parent=0 // loop_footer_branch
    %8 = sbr.rel target = $region3
  $region8: #{upsample_conv1x1.1} parent=0 // loop_exit
    _

</llo_original>
